<compile_context>
chip_gen: v7x
topology: tpu7x:2x2x1
jax: 0.10.0
libtpu: 0.0.40
codegen_flags: <defaults>
</compile_context>

<pallas_src>
import functools

import jax
import jax.numpy as jnp
from jax.experimental import pallas as pl
from jax.experimental.pallas import tpu as pltpu

BN_EPS = 1e-5


# ----------------------------------------------------------------------------
# Kernel 1: per-pixel weight generation (BN already folded into w1 / b1).
#   x_ref  : (1, C, TP)       pixel-column slab of one batch
#   w1_ref : (Crd, C)         folded conv1 weight (transposed)
#   b1_ref : (Crd, 1)         folded conv1/BN bias
#   w2_ref : (KK*G, Crd)      conv2 weight (transposed)
#   b2_ref : (KK*G, 1)        conv2 bias
#   o_ref  : (1, KK*G, TP)
# ----------------------------------------------------------------------------
def _weight_gen_kernel(x_ref, w1_ref, b1_ref, w2_ref, b2_ref, o_ref):
    x = x_ref[0]                                                   # (C, TP)
    h = jnp.dot(w1_ref[...], x, preferred_element_type=jnp.float32)
    h = jnp.maximum(h + b1_ref[...], 0.0)                          # (Crd, TP)
    o = jnp.dot(w2_ref[...], h, preferred_element_type=jnp.float32)
    o_ref[0] = o + b2_ref[...]                                     # (KK*G, TP)


# ----------------------------------------------------------------------------
# Kernel 2: involution aggregation for GB (batch, group) slices.
#   x_ref : (GB, GS, H*W)   activations of the groups (lane-dense pixel axis)
#   w_ref : (GB, KK, H*W)   per-pixel kernels (KK on sublane axis)
#   o_ref : (GB, GS, H*W)
# Boundary "padding" is implemented with masks on the rolled taps, so no padded
# copy of x is ever materialized in HBM or VMEM.
# ----------------------------------------------------------------------------
def _involution_kernel(x_ref, w_ref, o_ref, *, H, W, K, GB):
    HW = H * W
    c = (K - 1) // 2
    pos = jax.lax.broadcasted_iota(jnp.int32, (1, HW), 1)          # flat pixel id
    col = pos % W                                                  # column index

    for g in range(GB):                     # small static unroll (GB <= 8)
        x = x_ref[g]                        # (GS, HW)
        w = w_ref[g]                        # (KK, HW)
        acc = jnp.zeros_like(x)
        for kh in range(K):
            dh = kh - c
            for kw in range(K):
                dw = kw - c
                k = kh * K + kw
                shift = dh * W + dw
                wk = w[k:k + 1, :]                                 # (1, HW)
                if shift == 0:
                    acc = acc + x * wk
                else:
                    # xs[p] = x[p + shift]  (circular; invalid taps masked below)
                    xs = pltpu.roll(x, (-shift) % HW, axis=1)
                    src = pos + shift
                    valid = ((src >= 0) & (src < HW)
                             & (col + dw >= 0) & (col + dw < W))   # (1, HW)
                    acc = acc + xs * jnp.where(valid, wk, 0.0)
        o_ref[g] = acc


# ----------------------------------------------------------------------------
# Block-size helpers.
# ----------------------------------------------------------------------------
def _pick_pixel_tile(HW):
    """Lane-dense pixel tile for the weight-gen kernel."""
    if HW % 128 == 0:
        tp = min(HW, 2048)
        while HW % tp:
            tp //= 2
        return tp
    return HW                      # full last dim -> no (8,128) constraint


def _pick_gb(bg, hw, gs, kk):
    """Number of (batch, group) slices per aggregation grid step."""
    per_slice = hw * (2 * gs + kk) * 4          # x + out + w bytes per slice
    cap = max(1, (2 * 1024 * 1024) // per_slice)
    cap = min(cap, 8)                           # keep static unroll small
    if bg >= 2:
        cap = min(cap, bg // 2)                 # >=2 grid steps (megacore)
    gb = 1
    for d in range(1, bg + 1):
        if bg % d == 0 and d <= cap:
            gb = d
    return gb


# ----------------------------------------------------------------------------
# Forward wrapper.
# ----------------------------------------------------------------------------
def involution_forward(x_nchw, params, *, kernel_size=3, group_size=16):
    B, C, H, W = x_nchw.shape
    K = kernel_size
    KK = K * K
    GS = group_size
    G = C // GS
    Crd = params["w1"].shape[1]
    HW = H * W

    x3 = x_nchw.reshape(B, C, HW).astype(jnp.float32)              # no transpose

    # ---- fold BN (eval mode) into conv1, pre-transpose the tiny weights ----
    s = params["gamma"] * jax.lax.rsqrt(params["var"] + BN_EPS)
    w1t = (params["w1"] * s[None, :]).T.astype(jnp.float32)        # (Crd, C)
    b1 = (params["beta"] - params["mean"] * s).reshape(Crd, 1).astype(jnp.float32)
    w2t = params["w2"].T.astype(jnp.float32)                       # (KK*G, Crd)
    b2 = params["b2"].reshape(KK * G, 1).astype(jnp.float32)

    # ---- stage 1: per-pixel weight generation ----
    TP = _pick_pixel_tile(HW)
    n_hw = HW // TP

    wgen = pl.pallas_call(
        _weight_gen_kernel,
        out_shape=jax.ShapeDtypeStruct((B, KK * G, HW), jnp.float32),
        grid=(B, n_hw),
        in_specs=[
            pl.BlockSpec((1, C, TP), lambda b, j: (b, 0, j)),
            pl.BlockSpec((Crd, C), lambda b, j: (0, 0)),
            pl.BlockSpec((Crd, 1), lambda b, j: (0, 0)),
            pl.BlockSpec((KK * G, Crd), lambda b, j: (0, 0)),
            pl.BlockSpec((KK * G, 1), lambda b, j: (0, 0)),
        ],
        out_specs=pl.BlockSpec((1, KK * G, TP), lambda b, j: (b, 0, j)),
        compiler_params=pltpu.CompilerParams(
            dimension_semantics=("parallel", "parallel"),
            vmem_limit_bytes=32 * 1024 * 1024),
    )(x3, w1t, b1, w2t, b2)

    # ---- stage 2: involution aggregation ----
    BG = B * G
    x_bg = x3.reshape(BG, GS, HW)          # channel c -> (g, gs); pure reshape
    w_bg = wgen.reshape(BG, KK, HW)        # conv2 channel e -> (g, k); pure reshape

    GB = _pick_gb(BG, HW, GS, KK)

    out_bg = pl.pallas_call(
        functools.partial(_involution_kernel, H=H, W=W, K=K, GB=GB),
        out_shape=jax.ShapeDtypeStruct((BG, GS, HW), jnp.float32),
        grid=(BG // GB,),
        in_specs=[
            pl.BlockSpec((GB, GS, HW), lambda i: (i, 0, 0)),
            pl.BlockSpec((GB, KK, HW), lambda i: (i, 0, 0)),
        ],
        out_specs=pl.BlockSpec((GB, GS, HW), lambda i: (i, 0, 0)),
        compiler_params=pltpu.CompilerParams(
            dimension_semantics=("parallel",),
            vmem_limit_bytes=32 * 1024 * 1024),
    )(x_bg, w_bg)

    return out_bg.reshape(B, C, H, W)


# ----------------------------------------------------------------------------
# Pure-JAX reference (mirrors the PyTorch forward, NCHW) for verification.
# ----------------------------------------------------------------------------
def involution_reference(x, params, *, kernel_size=3, group_size=16):
    B, C, H, W = x.shape
    K = kernel_size
    KK = K * K
    GS = group_size
    G = C // GS
    pad = (K - 1) // 2

    h = jnp.einsum("bchw,cd->bdhw", x, params["w1"])
    inv_std = jax.lax.rsqrt(params["var"] + BN_EPS)
    h = ((h - params["mean"][None, :, None, None])
         * (params["gamma"] * inv_std)[None, :, None, None]
         + params["beta"][None, :, None, None])
    h = jnp.maximum(h, 0.0)
    weight = jnp.einsum("bdhw,de->behw", h, params["w2"]) \
        + params["b2"][None, :, None, None]
    weight = weight.reshape(B, G, KK, H, W)[:, :, None]            # (B,G,1,KK,H,W)

    xp = jnp.pad(x, ((0, 0), (0, 0), (pad, pad), (pad, pad)))
    patches = jnp.stack(
        [xp[:, :, kh:kh + H, kw:kw + W] for kh in range(K) for kw in range(K)],
        axis=2)                                                     # (B,C,KK,H,W)
    patches = patches.reshape(B, G, GS, KK, H, W)
    out = (weight * patches).sum(axis=3).reshape(B, C, H, W)
    return out


if __name__ == "__main__":
    # small but valid shapes: channels must be a multiple of group_size (16)
    B, C, H, W = 2, 32, 16, 16
    kernel_size, group_size, rd_ratio = 3, 16, 4
    G = C // group_size
    Crd = C // rd_ratio
    KK = kernel_size * kernel_size

    key = jax.random.PRNGKey(0)
    ks = jax.random.split(key, 8)
    x = jax.random.normal(ks[0], (B, C, H, W), jnp.float32)
    params = {
        "w1": jax.random.normal(ks[1], (C, Crd), jnp.float32) * 0.1,     # conv1 (no bias, BN follows)
        "gamma": jax.random.normal(ks[2], (Crd,), jnp.float32) * 0.1 + 1.0,
        "beta": jax.random.normal(ks[3], (Crd,), jnp.float32) * 0.1,
        "mean": jax.random.normal(ks[4], (Crd,), jnp.float32) * 0.1,     # BN running stats (eval mode)
        "var": jnp.abs(jax.random.normal(ks[5], (Crd,), jnp.float32)) * 0.1 + 1.0,
        "w2": jax.random.normal(ks[6], (Crd, KK * G), jnp.float32) * 0.1,
        "b2": jax.random.normal(ks[7], (KK * G,), jnp.float32) * 0.1,
    }

    out = involution_forward(x, params, kernel_size=kernel_size,
                             group_size=group_size)
    out = jax.block_until_ready(out)

    ref = involution_reference(x, params, kernel_size=kernel_size,
                               group_size=group_size)
    assert out.shape == (B, C, H, W)
    assert jnp.allclose(out, ref, rtol=1e-4, atol=1e-4), \
        f"max abs err {jnp.max(jnp.abs(out - ref))}"

    print("KERNEL_OK")
</pallas_src>

<mosaic_0001>
module attributes {stable_mosaic.version = 11 : i64} {
  func.func @_weight_gen_kernel(%arg0: i32, %arg1: i32, %arg2: memref<1x32x256xf32, #tpu.memory_space<vmem>>, %arg3: memref<8x32xf32, #tpu.memory_space<vmem>>, %arg4: memref<8x1xf32, #tpu.memory_space<vmem>>, %arg5: memref<18x8xf32, #tpu.memory_space<vmem>>, %arg6: memref<18x1xf32, #tpu.memory_space<vmem>>, %arg7: memref<1x18x256xf32, #tpu.memory_space<vmem>>) attributes {dimension_semantics = [#tpu.dimension_semantics<parallel>, #tpu.dimension_semantics<parallel>], iteration_bounds = array<i64: 2, 1>, scalar_prefetch = 0 : i64, scratch_operands = 0 : i64, tpu.core_type = #tpu.core_type<tc>, window_params = [{transform_indices = @transform_0, window_bounds = array<i64: 1, 32, 256>}, {pipeline_mode = #tpu.pipeline_mode<synchronous>, transform_indices = @transform_1, window_bounds = array<i64: 8, 32>}, {pipeline_mode = #tpu.pipeline_mode<synchronous>, transform_indices = @transform_2, window_bounds = array<i64: 8, 1>}, {pipeline_mode = #tpu.pipeline_mode<synchronous>, transform_indices = @transform_3, window_bounds = array<i64: 18, 8>}, {pipeline_mode = #tpu.pipeline_mode<synchronous>, transform_indices = @transform_4, window_bounds = array<i64: 18, 1>}, {transform_indices = @transform_5, window_bounds = array<i64: 1, 18, 256>}]} {
    %c0 = arith.constant 0 : index
    %c0_0 = arith.constant 0 : index
    %c0_1 = arith.constant 0 : index
    %0 = vector.load %arg2[%c0, %c0_0, %c0_1] : memref<1x32x256xf32, #tpu.memory_space<vmem>>, vector<1x32x256xf32>
    %1 = vector.shape_cast %0 : vector<1x32x256xf32> to vector<32x256xf32>
    %c0_2 = arith.constant 0 : index
    %c0_3 = arith.constant 0 : index
    %2 = vector.load %arg3[%c0_2, %c0_3] : memref<8x32xf32, #tpu.memory_space<vmem>>, vector<8x32xf32>
    %cst = arith.constant dense<0.000000e+00> : vector<8x256xf32>
    %3 = tpu.matmul %2, %1, %cst {dimension_numbers = #tpu.dot_dimension_numbers<[1], [0], [0], [1], [0, 0, 1, 1], [], []>} : vector<8x32xf32>, vector<32x256xf32>, vector<8x256xf32> -> vector<8x256xf32>
    %c0_4 = arith.constant 0 : index
    %c0_5 = arith.constant 0 : index
    %4 = vector.load %arg4[%c0_4, %c0_5] : memref<8x1xf32, #tpu.memory_space<vmem>>, vector<8x1xf32>
    %5 = vector.broadcast %4 : vector<8x1xf32> to vector<8x256xf32>
    %6 = arith.addf %3, %5 : vector<8x256xf32>
    %cst_6 = arith.constant 0.000000e+00 : f32
    %7 = vector.broadcast %cst_6 : f32 to vector<8x256xf32>
    %8 = arith.maximumf %6, %7 : vector<8x256xf32>
    %c0_7 = arith.constant 0 : index
    %c0_8 = arith.constant 0 : index
    %9 = vector.load %arg5[%c0_7, %c0_8] : memref<18x8xf32, #tpu.memory_space<vmem>>, vector<18x8xf32>
    %cst_9 = arith.constant dense<0.000000e+00> : vector<18x256xf32>
    %10 = tpu.matmul %9, %8, %cst_9 {dimension_numbers = #tpu.dot_dimension_numbers<[1], [0], [0], [1], [0, 0, 1, 1], [], []>} : vector<18x8xf32>, vector<8x256xf32>, vector<18x256xf32> -> vector<18x256xf32>
    %c0_10 = arith.constant 0 : index
    %c0_11 = arith.constant 0 : index
    %11 = vector.load %arg6[%c0_10, %c0_11] : memref<18x1xf32, #tpu.memory_space<vmem>>, vector<18x1xf32>
    %12 = vector.broadcast %11 : vector<18x1xf32> to vector<18x256xf32>
    %13 = arith.addf %10, %12 : vector<18x256xf32>
    %c0_12 = arith.constant 0 : index
    %c0_13 = arith.constant 0 : index
    %c0_14 = arith.constant 0 : index
    %14 = vector.load %arg7[%c0_12, %c0_13, %c0_14] : memref<1x18x256xf32, #tpu.memory_space<vmem>>, vector<1x18x256xf32>
    %15 = vector.shape_cast %14 : vector<1x18x256xf32> to vector<18x256xf32>
    %16 = vector.shape_cast %13 : vector<18x256xf32> to vector<1x18x256xf32>
    tpu.vector_store %arg7[%c0_12, %c0_13, %c0_14], %16 {strides = array<i32>} : memref<1x18x256xf32, #tpu.memory_space<vmem>>, vector<1x18x256xf32>,
    return
  }
  func.func @transform_0(%arg0: i32, %arg1: i32) -> (i32, i32, i32) {
    %c0_i32 = arith.constant 0 : i32
    %c0_i32_0 = arith.constant 0 : i32
    return %arg0, %c0_i32, %arg1 : i32, i32, i32
  }
  func.func @transform_1(%arg0: i32, %arg1: i32) -> (i32, i32) {
    %c0_i32 = arith.constant 0 : i32
    %c0_i32_0 = arith.constant 0 : i32
    %c0_i32_1 = arith.constant 0 : i32
    return %c0_i32, %c0_i32_0 : i32, i32
  }
  func.func @transform_2(%arg0: i32, %arg1: i32) -> (i32, i32) {
    %c0_i32 = arith.constant 0 : i32
    %c0_i32_0 = arith.constant 0 : i32
    %c0_i32_1 = arith.constant 0 : i32
    return %c0_i32, %c0_i32_0 : i32, i32
  }
  func.func @transform_3(%arg0: i32, %arg1: i32) -> (i32, i32) {
    %c0_i32 = arith.constant 0 : i32
    %c0_i32_0 = arith.constant 0 : i32
    %c0_i32_1 = arith.constant 0 : i32
    return %c0_i32, %c0_i32_0 : i32, i32
  }
  func.func @transform_4(%arg0: i32, %arg1: i32) -> (i32, i32) {
    %c0_i32 = arith.constant 0 : i32
    %c0_i32_0 = arith.constant 0 : i32
    %c0_i32_1 = arith.constant 0 : i32
    return %c0_i32, %c0_i32_0 : i32, i32
  }
  func.func @transform_5(%arg0: i32, %arg1: i32) -> (i32, i32, i32) {
    %c0_i32 = arith.constant 0 : i32
    %c0_i32_0 = arith.constant 0 : i32
    return %arg0, %c0_i32, %arg1 : i32, i32, i32
  }
}

</mosaic_0001>

<llo_original>
// kernel: tpu_custom_call.1
$region0: #{tpu_custom_call.1}
  #allocation0 [shape = 'u32[]', space=smem, size = 0x4, offset = 0x4, fixed_abs, tag = 'smem constant byte address 0x4 - core index']
  #allocation1 [shape = 'u32[144,128]{1,0:T(1,128)}', space=vmem, size = 0x12000, scoped, tag = 'internal scratch']
  %s0 = inlined_call_operand.hbm [shape: f32[2,32,256], index: 0, kind: input, shape index: {}]
  %s1 = inlined_call_operand.vmem [shape: f32[8,32], index: 1, kind: input, shape index: {}]
  %s2 = inlined_call_operand.vmem [shape: f32[8,1], index: 2, kind: input, shape index: {}]
  %s3 = inlined_call_operand.vmem [shape: f32[18,8], index: 3, kind: input, shape index: {}]
  %s4 = inlined_call_operand.vmem [shape: f32[18,1], index: 4, kind: input, shape index: {}]
  %s5 = inlined_call_operand.vmem [shape: f32[2,18,256], index: 5, kind: output, shape index: {}]
  %s6 = sld [smem:[#allocation0]]
  $region57: #{tpu_custom_call.1} parent=0
    _
  %s8 = ssub.s32 1, %s6
  %s9 = scalar_select 0, %s8, %s6
  $region1: #{tpu_custom_call.1} parent=0
    #allocation2 [shape = 'u8[65536]{0}', space=vmem, size = 0x10000, scoped, tag = 'input window, operand 0']
    #allocation3 [shape = 's32[2]{0}', space=sflag, size = 0x8, scoped, tag = 'scoped memory for tpu_custom_call.1']
    %10 = vsyncpa [#allocation3], 0
    %s11 = scalar_lea.sflag [#allocation3], 1
    %12 = vsyncpa %s11, 0
    loop: start=0, step=1, limit=4
    $region2: #{tpu_custom_call.1} parent=1 // loop_pre_header
      _
    $region3: #{tpu_custom_call.1} parent=1 // loop_header
      %s14 = sphi 0, %s18
      %p15 = scmp.ge.s32.totalorder %s14, 4
      %s21 = sphi 0, %s33
      %s22 = sphi 0, %s29
      %s23 = sphi 0, %s21
      %s24 = sphi 0, %s22
      %s25 = sphi 0, %s23
      %s26 = sphi 0, %s24
      %s38 = sphi 0, %s40
      %s41 = sphi 0, %s38
      %s42 = sphi 0, %s41
      %s58 = sphi 0, %s42
      %s62 = sphi 0, %s62
      %s64 = sphi 0, %s62
      %s65 = sphi 0, %s64
      %s79 = sphi 0, %s65
      %s83 = sphi 0, %s83
      %s85 = sphi 0, %s83
      %s86 = sphi 0, %s85
      %s100 = sphi 0, %s86
      %s104 = sphi 0, %s104
      %s106 = sphi 0, %s104
      %s107 = sphi 0, %s106
      %s121 = sphi 0, %s107
      %s125 = sphi 0, %s125
      %s127 = sphi 0, %s125
      %s128 = sphi 0, %s127
      %s142 = sphi 0, %s128
      %s150 = sphi 0, %s152
      %s153 = sphi 0, %s150
      %s154 = sphi 0, %s153
      %s170 = sphi 0, %s154
    $region4: #{tpu_custom_call.1} parent=1 // loop_header_branch
      %17 = sbr.rel (%p15) target = $region8
    $region5: #{tpu_custom_call.1} parent=1 // loop_body
      %s19 = ssub.s32 %s14, 1
      %s20 = ssub.s32 %s14, 2
      %s27 = sadd.s32 1, %s22
      %p28 = scmp.ge.s32.totalorder %s27, 1
      %s29 = scalar_select %p28, 0, %s27
      %s30 = sadd.s32 1, %s21
      %s31 = scalar_select %p28, %s30, %s21
      %p32 = scmp.ge.s32.totalorder %s31, 2
      %s33 = scalar_select %p32, 0, %s31
      %s34 = ssub.s32 %s21, %s33
      %s35 = ssub.s32 %s22, %s29
      %s36 = sor.u32 %s34, %s35
      %p37 = scmp.eq.s32.totalorder %s36, 0
      %s39 = sadd.s32 %s38, 1
      %s40 = scalar_select %p37, %s38, %s39
      %p43 = pneg %p37
      %p44 = scmp.eq.s32.totalorder %s14, 1
      %p45 = por %p43, %p44
      %p46 = scmp.ne.s32.totalorder %s38, %s41
      %p47 = scmp.eq.s32.totalorder %s14, 0
      %p48 = por %p46, %p47
      %p49 = scmp.ne.s32.totalorder %s38, %s41
      %p50 = scmp.eq.s32.totalorder %s19, 1
      %p51 = por %p49, %p50
      %p52 = scmp.ne.s32.totalorder %s41, %s42
      %p53 = scmp.eq.s32.totalorder %s19, 0
      %p54 = por %p52, %p53
      %p55 = scmp.ne.s32.totalorder %s41, %s42
      %p56 = scmp.eq.s32.totalorder %s20, 1
      %p57 = por %p55, %p56
      %p59 = scmp.ne.s32.totalorder %s42, %s58
      %p60 = scmp.eq.s32.totalorder %s20, 0
      %p61 = por %p59, %p60
      %s63 = sadd.s32 %s62, 1
      %p66 = scmp.eq.s32.totalorder %s14, 1
      %p67 = scmp.ne.s32.totalorder %s62, %s64
      %p68 = scmp.eq.s32.totalorder %s14, 0
      %p69 = por %p67, %p68
      %p70 = scmp.ne.s32.totalorder %s62, %s64
      %p71 = scmp.eq.s32.totalorder %s19, 1
      %p72 = por %p70, %p71
      %p73 = scmp.ne.s32.totalorder %s64, %s65
      %p74 = scmp.eq.s32.totalorder %s19, 0
      %p75 = por %p73, %p74
      %p76 = scmp.ne.s32.totalorder %s64, %s65
      %p77 = scmp.eq.s32.totalorder %s20, 1
      %p78 = por %p76, %p77
      %p80 = scmp.ne.s32.totalorder %s65, %s79
      %p81 = scmp.eq.s32.totalorder %s20, 0
      %p82 = por %p80, %p81
      %s84 = sadd.s32 %s83, 1
      %p87 = scmp.eq.s32.totalorder %s14, 1
      %p88 = scmp.ne.s32.totalorder %s83, %s85
      %p89 = scmp.eq.s32.totalorder %s14, 0
      %p90 = por %p88, %p89
      %p91 = scmp.ne.s32.totalorder %s83, %s85
      %p92 = scmp.eq.s32.totalorder %s19, 1
      %p93 = por %p91, %p92
      %p94 = scmp.ne.s32.totalorder %s85, %s86
      %p95 = scmp.eq.s32.totalorder %s19, 0
      %p96 = por %p94, %p95
      %p97 = scmp.ne.s32.totalorder %s85, %s86
      %p98 = scmp.eq.s32.totalorder %s20, 1
      %p99 = por %p97, %p98
      %p101 = scmp.ne.s32.totalorder %s86, %s100
      %p102 = scmp.eq.s32.totalorder %s20, 0
      %p103 = por %p101, %p102
      %s105 = sadd.s32 %s104, 1
      %p108 = scmp.eq.s32.totalorder %s14, 1
      %p109 = scmp.ne.s32.totalorder %s104, %s106
      %p110 = scmp.eq.s32.totalorder %s14, 0
      %p111 = por %p109, %p110
      %p112 = scmp.ne.s32.totalorder %s104, %s106
      %p113 = scmp.eq.s32.totalorder %s19, 1
      %p114 = por %p112, %p113
      %p115 = scmp.ne.s32.totalorder %s106, %s107
      %p116 = scmp.eq.s32.totalorder %s19, 0
      %p117 = por %p115, %p116
      %p118 = scmp.ne.s32.totalorder %s106, %s107
      %p119 = scmp.eq.s32.totalorder %s20, 1
      %p120 = por %p118, %p119
      %p122 = scmp.ne.s32.totalorder %s107, %s121
      %p123 = scmp.eq.s32.totalorder %s20, 0
      %p124 = por %p122, %p123
      %s126 = sadd.s32 %s125, 1
      %p129 = scmp.eq.s32.totalorder %s14, 1
      %p130 = scmp.ne.s32.totalorder %s125, %s127
      %p131 = scmp.eq.s32.totalorder %s14, 0
      %p132 = por %p130, %p131
      %p133 = scmp.ne.s32.totalorder %s125, %s127
      %p134 = scmp.eq.s32.totalorder %s19, 1
      %p135 = por %p133, %p134
      %p136 = scmp.ne.s32.totalorder %s127, %s128
      %p137 = scmp.eq.s32.totalorder %s19, 0
      %p138 = por %p136, %p137
      %p139 = scmp.ne.s32.totalorder %s127, %s128
      %p140 = scmp.eq.s32.totalorder %s20, 1
      %p141 = por %p139, %p140
      %p143 = scmp.ne.s32.totalorder %s128, %s142
      %p144 = scmp.eq.s32.totalorder %s20, 0
      %p145 = por %p143, %p144
      %s146 = ssub.s32 %s21, %s33
      %s147 = ssub.s32 %s22, %s29
      %s148 = sor.u32 %s146, %s147
      %p149 = scmp.eq.s32.totalorder %s148, 0
      %s151 = sadd.s32 %s150, 1
      %s152 = scalar_select %p149, %s150, %s151
      %p155 = pneg %p149
      %p156 = scmp.eq.s32.totalorder %s14, 1
      %p157 = por %p155, %p156
      %p158 = scmp.ne.s32.totalorder %s150, %s153
      %p159 = scmp.eq.s32.totalorder %s14, 0
      %p160 = por %p158, %p159
      %p161 = scmp.ne.s32.totalorder %s150, %s153
      %p162 = scmp.eq.s32.totalorder %s19, 1
      %p163 = por %p161, %p162
      %p164 = scmp.ne.s32.totalorder %s153, %s154
      %p165 = scmp.eq.s32.totalorder %s19, 0
      %p166 = por %p164, %p165
      %p167 = scmp.ne.s32.totalorder %s153, %s154
      %p168 = scmp.eq.s32.totalorder %s20, 1
      %p169 = por %p167, %p168
      %p171 = scmp.ne.s32.totalorder %s154, %s170
      %p172 = scmp.eq.s32.totalorder %s20, 0
      %p173 = por %p171, %p172
      %p174 = scmp.le.s32.totalorder 1, %s14
      %p175 = scmp.lt.s32.totalorder %s14, 3
      %p176 = pnand %p174, %p175
      %p177 = pneg %p176
      // Predicated region
      $region9: #{tpu_custom_call.1} parent=5 // pred_check
        _
      $region10: #{tpu_custom_call.1} parent=5 // pred_check_branch
        %179 = sbr.rel (%p176) target = $region12
      $region11: #{tpu_custom_call.1} parent=5 // pred_region
        %s180 = ssub.s32 %s14, 1
        // Predicated region
        $region13: #{tpu_custom_call.1} parent=11 // pred_check
          %p181 = pneg %p75
        $region14: #{tpu_custom_call.1} parent=11 // pred_check_branch
          %183 = sbr.rel (%p181) target = $region16
        $region15: #{tpu_custom_call.1} parent=11 // pred_region
          _
        $region16: #{tpu_custom_call.1} parent=11 // pred_fallthru
          _
        // Predicated region
        $region17: #{tpu_custom_call.1} parent=11 // pred_check
          %p184 = pneg %p96
        $region18: #{tpu_custom_call.1} parent=11 // pred_check_branch
          %186 = sbr.rel (%p184) target = $region20
        $region19: #{tpu_custom_call.1} parent=11 // pred_region
          _
        $region20: #{tpu_custom_call.1} parent=11 // pred_fallthru
          _
        // Predicated region
        $region21: #{tpu_custom_call.1} parent=11 // pred_check
          %p187 = pneg %p117
        $region22: #{tpu_custom_call.1} parent=11 // pred_check_branch
          %189 = sbr.rel (%p187) target = $region24
        $region23: #{tpu_custom_call.1} parent=11 // pred_region
          _
        $region24: #{tpu_custom_call.1} parent=11 // pred_fallthru
          _
        // Predicated region
        $region25: #{tpu_custom_call.1} parent=11 // pred_check
          %p190 = pneg %p138
        $region26: #{tpu_custom_call.1} parent=11 // pred_check_branch
          %192 = sbr.rel (%p190) target = $region28
        $region27: #{tpu_custom_call.1} parent=11 // pred_region
          _
        $region28: #{tpu_custom_call.1} parent=11 // pred_fallthru
          _
      $region12: #{tpu_custom_call.1} parent=5 // pred_fallthru
        _
      %p193 = scmp.lt.s32.totalorder %s14, 2
      // Predicated region
      $region29: #{tpu_custom_call.1} parent=5 // pred_check
        %p194 = pneg %p193
      $region30: #{tpu_custom_call.1} parent=5 // pred_check_branch
        %196 = sbr.rel (%p194) target = $region32
      $region31: #{tpu_custom_call.1} parent=5 // pred_region
        // Predicated region
        $region33: #{tpu_custom_call.1} parent=31 // pred_check
          %p197 = pneg %p48
        $region34: #{tpu_custom_call.1} parent=31 // pred_check_branch
          %199 = sbr.rel (%p197) target = $region36
        $region35: #{tpu_custom_call.1} parent=31 // pred_region
          %s200 = sand.u32 %s38, 1
          %s201 = scalar_lea.sflag [#allocation3], %s200
          %s202 = sand.u32 %s38, 1
          %s203 = smul.addr %s202, 64
          %s204 = scalar_lea.vmem [#allocation2], %s203
          %s205 = smul.u32 2, %s22
          %s207 = ssub.s32 1024, 1024
          %208 = vsyncadd %s201, %s207
          %s209 = smul.addr %s21, 8
          %s210 = sadd.s32 %s205, %s209
          %s211 = smul.addr %s210, 128
          %s212 = scalar_lea.hbm %s0, %s211
          %s213 = sshll.u32 %s204, 4
          %s214 = int_to_ptr.vmem [resolvable:$true] %s213
          %219 = dma.hbm_to_vmem [thread:$0]  %s212, 1024, %s214, %s201, 256, 256, 16
        $region36: #{tpu_custom_call.1} parent=31 // pred_fallthru
          _
      $region32: #{tpu_custom_call.1} parent=5 // pred_fallthru
        _
      %p220 = scmp.le.s32.totalorder 1, %s14
      %p221 = scmp.lt.s32.totalorder %s14, 3
      %p222 = pnand %p220, %p221
      %p223 = pneg %p222
      // Predicated region
      $region37: #{tpu_custom_call.1} parent=5 // pred_check
        _
      $region38: #{tpu_custom_call.1} parent=5 // pred_check_branch
        %225 = sbr.rel (%p222) target = $region40
      $region39: #{tpu_custom_call.1} parent=5 // pred_region
        %s226 = ssub.s32 %s14, 1
        %s227 = sand.u32 %s41, 1
        %s228 = scalar_lea.sflag [#allocation3], %s227
        %s229 = sand.u32 %s41, 1
        %s230 = smul.addr %s229, 64
        %s231 = scalar_lea.vmem [#allocation2], %s230
        // Predicated region
        $region41: #{tpu_custom_call.1} parent=39 // pred_check
          %p232 = pneg %p54
        $region42: #{tpu_custom_call.1} parent=39 // pred_check_branch
          %234 = sbr.rel (%p232) target = $region44
        $region43: #{tpu_custom_call.1} parent=39 // pred_region
          %235 = dma.done %s228, 1024
        $region44: #{tpu_custom_call.1} parent=39 // pred_fallthru
          _
        %s236 = sand.u32 %s41, 1
        %s237 = scalar_lea.sflag [#allocation3], %s236
        %s238 = sand.u32 %s41, 1
        %s239 = smul.addr %s238, 64
        %s240 = scalar_lea.vmem [#allocation2], %s239
        %p241 = pneg %p54
        %p242 = pneg %p51
        %p243 = pneg %p75
        %p244 = pneg %p72
        %p245 = pneg %p96
        %p246 = pneg %p93
        %p247 = pneg %p117
        %p248 = pneg %p114
        %p249 = pneg %p138
        %p250 = pneg %p135
        %p251 = pneg %p166
        %p252 = pneg %p163
        %s253 = smul.u32 2, %s24
        %p254 = scmp.lt.s32.totalorder %s23, 1
        %s255 = scalar_select %p254, %s23, 1
        %p256 = scmp.lt.s32.totalorder %s253, 1
        %s257 = scalar_select %p256, %s253, 1
        %s258 = smul.addr %s255, 6
        %s259 = sadd.s32 %s257, %s258
        %s260 = smul.addr %s259, 8
        %s261 = scalar_lea.vmem %s5, %s260
        %s262 = smul.u32 2, %s24
        %s263 = smul.u32 2, %s24
        %p264 = scmp.lt.s32.totalorder %s23, 1
        %s265 = scalar_select %p264, %s23, 1
        %p266 = scmp.lt.s32.totalorder %s263, 1
        %s267 = scalar_select %p266, %s263, 1
        %s268 = smul.addr %s265, 6
        %s269 = sadd.s32 %s267, %s268
        %s270 = smul.addr %s269, 8
        %s271 = scalar_lea.vmem %s5, %s270
        %s272 = smul.u32 2, %s24
        %v273 = vld [vmem:[%s231] sm:$0xff]
        %v274 = vld [vmem:[%s231 + $0x8] sm:$0xff]
        %v275 = vld [vmem:[%s231 + $0x10] sm:$0xff]
        %v276 = vld [vmem:[%s231 + $0x18] sm:$0xff]
        %v277 = vld [vmem:[%s231 + $0x20] sm:$0xff]
        %v278 = vld [vmem:[%s231 + $0x28] sm:$0xff]
        %v279 = vld [vmem:[%s231 + $0x30] sm:$0xff]
        %v280 = vld [vmem:[%s231 + $0x38] sm:$0xff]
        %v281 = vld [vmem:[%s1] sm:$0xff]
        %v282 = vld [vmem:[%s2] sm:$0xff]
        %284 = vset.pattern.permute.xlu0 0
        %285 = vperm.xlu0 %284, %v282
        %v286 = vpop.permute.xlu0 %285
        %vm288 = vcmask 261120
        %v290 = vsel %vm288, %v281, 0
        %292 = vmatprep.subr.mxu0 %v274
        %293 = vmatpush1.msra.mxu0 %v273
        %294 = vmatprep.subr.mxu0 %v276
        %295 = vmatpush1.msra.mxu0 %v275
        %296 = vmatprep.subr.mxu0 %v278
        %297 = vmatpush1.msra.mxu0 %v277
        %298 = vmatprep.subr.mxu0 %v280
        %299 = vmatpush1.msra.mxu0 %v279
        %300 = vmatprep.subr.mxu0 0.0
        %301 = vmatpush1.msra.mxu0 0.0
        %302 = vmatprep.subr.mxu0 0.0
        %303 = vmatpush1.msra.mxu0 0.0
        %304 = vmatprep.subr.mxu0 0.0
        %305 = vmatpush1.msra.mxu0 0.0
        %306 = vmatprep.subr.mxu0 0.0
        %307 = vmatpush1.msra.mxu0 0.0
        %308 = vmatprep.subr.mxu0 0.0
        %309 = vmatpush1.msra.mxu0 0.0
        %310 = vmatprep.subr.mxu0 0.0
        %311 = vmatpush1.msra.mxu0 0.0
        %312 = vmatprep.subr.mxu0 0.0
        %313 = vmatpush1.msra.mxu0 0.0
        %314 = vmatprep.subr.mxu0 0.0
        %315 = vmatpush1.msra.mxu0 0.0
        %316 = vmatprep.subr.mxu0 0.0
        %317 = vmatpush1.msra.mxu0 0.0
        %318 = vmatprep.subr.mxu0 0.0
        %319 = vmatpush1.msra.mxu0 0.0
        %320 = vmatprep.subr.mxu0 0.0
        %321 = vmatpush1.msra.mxu0 0.0
        %322 = vmatprep.subr.mxu0 0.0
        %323 = vmatpush1.msra.mxu0 0.0
        %324 = vmatprep.subr.mxu0 0.0
        %325 = vmatpush1.msra.mxu0 0.0
        %326 = vmatprep.subr.mxu0 0.0
        %327 = vmatpush1.msra.mxu0 0.0
        %328 = vmatprep.subr.mxu0 0.0
        %329 = vmatpush1.msra.mxu0 0.0
        %330 = vmatprep.subr.mxu0 0.0
        %331 = vmatpush1.msra.mxu0 0.0
        %332 = vmatprep.subr.mxu0 0.0
        %333 = vmatpush1.msra.mxu0 0.0
        %334 = vmatprep.subr.mxu0 0.0
        %335 = vmatpush1.msra.mxu0 0.0
        %336 = vmatprep.subr.mxu0 0.0
        %337 = vmatpush1.msra.mxu0 0.0
        %338 = vmatprep.subr.mxu0 0.0
        %339 = vmatpush1.msra.mxu0 0.0
        %340 = vmatprep.subr.mxu0 0.0
        %341 = vmatpush1.msra.mxu0 0.0
        %342 = vmatprep.subr.mxu0 0.0
        %343 = vmatpush1.msra.mxu0 0.0
        %344 = vmatprep.subr.mxu0 0.0
        %345 = vmatpush1.msra.mxu0 0.0
        %346 = vmatprep.subr.mxu0 0.0
        %347 = vmatpush1.msra.mxu0 0.0
        %348 = vmatprep.subr.mxu0 0.0
        %349 = vmatpush1.msra.mxu0 0.0
        %350 = vmatprep.subr.mxu0 0.0
        %351 = vmatpush1.msra.mxu0 0.0
        %352 = vmatprep.subr.mxu0 0.0
        %353 = vmatpush1.msra.mxu0 0.0
        %354 = vmatprep.subr.mxu0 0.0
        %355 = vmatpush1.msra.mxu0 0.0
        %356 = vmatprep.mubr.f32.mxu0 0.0
        %357 = vmatmul.mubr.f32.gmra.mrb[0].mxu0 %v290
        %v358 = vpop.f32.mrb[0].mxu0
        %v359 = vadd.f32 %v286, %v358
        %v360 = vpop.f32.mrb[0].mxu0
        %v361 = vadd.f32 %v286, %v360
        %362 = vdwg.mxu0
        %v363 = vmax.f32 %v359, 0.0
        %v364 = vmax.f32 %v361, 0.0
        %v365 = vld [vmem:[%s3] sm:$0xff]
        %v366 = vld [vmem:[%s3 + $0x8] sm:$0xff]
        %v367 = vld [vmem:[%s3 + $0x10] sm:$0x3]
        %v368 = vld [vmem:[%s4] sm:$0xff]
        %v369 = vld [vmem:[%s4 + $0x8] sm:$0xff]
        %v370 = vld [vmem:[%s4 + $0x10] sm:$0x3]
        %372 = vset.pattern.permute.xlu0 0
        %373 = vperm.xlu0 %372, %v368
        %v374 = vpop.permute.xlu0 %373
        %377 = vset.pattern.permute.xlu0 0
        %378 = vperm.xlu0 %377, %v369
        %v379 = vpop.permute.xlu0 %378
        %382 = vset.pattern.permute.xlu0 0
        %383 = vperm.xlu0 %382, %v370
        %v384 = vpop.permute.xlu0 %383
        %vm386 = vcmask 64512
        %v388 = vsel %vm386, %v365, 0
        %v391 = vsel %vm386, %v366, 0
        %v394 = vsel %vm386, %v367, 0
        %396 = vmatprep.subr.mxu0 %v364
        %397 = vmatpush1.msra.mxu0 %v363
        %398 = vmatprep.subr.mxu0 0.0
        %399 = vmatpush1.msra.mxu0 0.0
        %400 = vmatprep.subr.mxu0 0.0
        %401 = vmatpush1.msra.mxu0 0.0
        %402 = vmatprep.subr.mxu0 0.0
        %403 = vmatpush1.msra.mxu0 0.0
        %404 = vmatprep.subr.mxu0 0.0
        %405 = vmatpush1.msra.mxu0 0.0
        %406 = vmatprep.subr.mxu0 0.0
        %407 = vmatpush1.msra.mxu0 0.0
        %408 = vmatprep.subr.mxu0 0.0
        %409 = vmatpush1.msra.mxu0 0.0
        %410 = vmatprep.subr.mxu0 0.0
        %411 = vmatpush1.msra.mxu0 0.0
        %412 = vmatprep.subr.mxu0 0.0
        %413 = vmatpush1.msra.mxu0 0.0
        %414 = vmatprep.subr.mxu0 0.0
        %415 = vmatpush1.msra.mxu0 0.0
        %416 = vmatprep.subr.mxu0 0.0
        %417 = vmatpush1.msra.mxu0 0.0
        %418 = vmatprep.subr.mxu0 0.0
        %419 = vmatpush1.msra.mxu0 0.0
        %420 = vmatprep.subr.mxu0 0.0
        %421 = vmatpush1.msra.mxu0 0.0
        %422 = vmatprep.subr.mxu0 0.0
        %423 = vmatpush1.msra.mxu0 0.0
        %424 = vmatprep.subr.mxu0 0.0
        %425 = vmatpush1.msra.mxu0 0.0
        %426 = vmatprep.subr.mxu0 0.0
        %427 = vmatpush1.msra.mxu0 0.0
        %428 = vmatprep.subr.mxu0 0.0
        %429 = vmatpush1.msra.mxu0 0.0
        %430 = vmatprep.subr.mxu0 0.0
        %431 = vmatpush1.msra.mxu0 0.0
        %432 = vmatprep.subr.mxu0 0.0
        %433 = vmatpush1.msra.mxu0 0.0
        %434 = vmatprep.subr.mxu0 0.0
        %435 = vmatpush1.msra.mxu0 0.0
        %436 = vmatprep.subr.mxu0 0.0
        %437 = vmatpush1.msra.mxu0 0.0
        %438 = vmatprep.subr.mxu0 0.0
        %439 = vmatpush1.msra.mxu0 0.0
        %440 = vmatprep.subr.mxu0 0.0
        %441 = vmatpush1.msra.mxu0 0.0
        %442 = vmatprep.subr.mxu0 0.0
        %443 = vmatpush1.msra.mxu0 0.0
        %444 = vmatprep.subr.mxu0 0.0
        %445 = vmatpush1.msra.mxu0 0.0
        %446 = vmatprep.subr.mxu0 0.0
        %447 = vmatpush1.msra.mxu0 0.0
        %448 = vmatprep.subr.mxu0 0.0
        %449 = vmatpush1.msra.mxu0 0.0
        %450 = vmatprep.subr.mxu0 0.0
        %451 = vmatpush1.msra.mxu0 0.0
        %452 = vmatprep.subr.mxu0 0.0
        %453 = vmatpush1.msra.mxu0 0.0
        %454 = vmatprep.subr.mxu0 0.0
        %455 = vmatpush1.msra.mxu0 0.0
        %456 = vmatprep.subr.mxu0 0.0
        %457 = vmatpush1.msra.mxu0 0.0
        %458 = vmatprep.subr.mxu0 0.0
        %459 = vmatpush1.msra.mxu0 0.0
        %460 = vmatprep.mubr.f32.mxu0 0.0
        %461 = vmatmul.mubr.f32.gmra.mrb[0].mxu0 %v388
        %v462 = vpop.f32.mrb[0].mxu0
        %v463 = vadd.f32 %v374, %v462
        %v464 = vpop.f32.mrb[0].mxu0
        %v465 = vadd.f32 %v374, %v464
        %466 = vmatprep.mubr.f32.mxu0 0.0
        %467 = vmatmul.mubr.f32.gmra.mrb[0].mxu0 %v391
        %v468 = vpop.f32.mrb[0].mxu0
        %v469 = vadd.f32 %v379, %v468
        %v470 = vpop.f32.mrb[0].mxu0
        %v471 = vadd.f32 %v379, %v470
        %472 = vmatprep.mubr.f32.mxu0 0.0
        %473 = vmatmul.mubr.f32.gmra.mrb[0].mxu0 %v394
        %v474 = vpop.f32.mrb[0].mxu0
        %v475 = vadd.f32 %v384, %v474
        %v476 = vpop.f32.mrb[0].mxu0
        %v477 = vadd.f32 %v384, %v476
        %478 = vdwg.mxu0
        %479 = vst [vmem:[%s271] sm:$0xff] %v463
        %480 = vst [vmem:[%s271 + $0x8] sm:$0xff] %v465
        %481 = vst [vmem:[%s271 + $0x10] sm:$0xff] %v469
        %482 = vst [vmem:[%s271 + $0x18] sm:$0xff] %v471
        %483 = vst [vmem:[%s271 + $0x20] sm:$0x3] %v475
        %484 = vst [vmem:[%s271 + $0x28] sm:$0x3] %v477
        %s485 = smul.u32 2, %s24
        %p486 = scmp.lt.s32.totalorder %s23, 1
        %s487 = scalar_select %p486, %s23, 1
        %p488 = scmp.lt.s32.totalorder %s485, 1
        %s489 = scalar_select %p488, %s485, 1
        %s490 = smul.addr %s487, 6
        %s491 = sadd.s32 %s489, %s490
        %s492 = smul.addr %s491, 8
        %s493 = scalar_lea.vmem %s5, %s492
        // Predicated region
        $region45: #{tpu_custom_call.1} parent=39 // pred_check
          %p494 = pneg %p163
        $region46: #{tpu_custom_call.1} parent=39 // pred_check_branch
          %496 = sbr.rel (%p494) target = $region48
        $region47: #{tpu_custom_call.1} parent=39 // pred_region
          %s497 = smul.u32 2, %s24
        $region48: #{tpu_custom_call.1} parent=39 // pred_fallthru
          _
      $region40: #{tpu_custom_call.1} parent=5 // pred_fallthru
        _
      %p498 = scmp.le.s32.totalorder 2, %s14
      // Predicated region
      $region49: #{tpu_custom_call.1} parent=5 // pred_check
        %p499 = pneg %p498
      $region50: #{tpu_custom_call.1} parent=5 // pred_check_branch
        %501 = sbr.rel (%p499) target = $region52
      $region51: #{tpu_custom_call.1} parent=5 // pred_region
        %s502 = ssub.s32 %s14, 2
        // Predicated region
        $region53: #{tpu_custom_call.1} parent=51 // pred_check
          %p503 = pneg %p169
        $region54: #{tpu_custom_call.1} parent=51 // pred_check_branch
          %505 = sbr.rel (%p503) target = $region56
        $region55: #{tpu_custom_call.1} parent=51 // pred_region
          %s506 = smul.u32 2, %s26
          %p507 = scmp.lt.s32.totalorder %s25, 1
          %s508 = scalar_select %p507, %s25, 1
          %p509 = scmp.lt.s32.totalorder %s506, 1
          %s510 = scalar_select %p509, %s506, 1
          %s511 = smul.addr %s508, 6
          %s512 = sadd.s32 %s510, %s511
          %s513 = smul.addr %s512, 8
          %s514 = scalar_lea.vmem %s5, %s513
        $region56: #{tpu_custom_call.1} parent=51 // pred_fallthru
          _
      $region52: #{tpu_custom_call.1} parent=5 // pred_fallthru
        _
    $region6: #{tpu_custom_call.1} parent=1 // loop_footer
      %s18 = sadd.s32 1, %s14
    $region7: #{tpu_custom_call.1} parent=1 // loop_footer_branch
      %13 = sbr.rel target = $region3
    $region8: #{tpu_custom_call.1} parent=1 // loop_exit
      _
    %515 = vsyncpa [#allocation3], 1
    %s516 = scalar_lea.sflag [#allocation3], 1
    %517 = vsyncpa %s516, 1

</llo_original>
